<compile_context>
chip_gen: v7x
topology: tpu7x:2x2x1
jax: 0.10.0
libtpu: 0.0.40
codegen_flags: <defaults>
</compile_context>

<pallas_src>
import jax
import jax.numpy as jnp
from jax.experimental import pallas as pl
from jax.experimental.pallas import tpu as pltpu

_STATE_DIM = 4
_LANES = 128
_WEIGHTS = (6.0, 0.1, 5.0, 0.1)     # per-state quadratic weights


def _make_cost_kernel(tile_rows: int, total_rows: int):
    """Streaming per-lane sum of squares over a (total_rows, 128) slab."""
    num_tiles = (total_rows + tile_rows - 1) // tile_rows
    tail_rows = total_rows - (num_tiles - 1) * tile_rows   # valid rows in last tile
    n_groups = tile_rows // 8

    def kernel(x_ref, o_ref):
        i = pl.program_id(0)

        @pl.when(i == 0)
        def _init():
            o_ref[...] = jnp.zeros_like(o_ref)

        xs = x_ref[...].astype(jnp.float32)      # (tile_rows, 128)
        sq = xs * xs

        def accumulate(vals):
            # (tile_rows,128) -> (n_groups,8,128) follows the (8,128) vreg
            # tiling exactly, so the reshape is layout-free and the axis-0 sum
            # is a pure VPU tree add into the single resident output vreg.
            o_ref[...] += vals.reshape(n_groups, 8, _LANES).sum(axis=0)

        if tail_rows == tile_rows:
            accumulate(sq)
        else:
            # The final tile overshoots the array; mask the garbage rows. The
            # mask bound is a Python constant and only the last step pays it.
            @pl.when(i < num_tiles - 1)
            def _full():
                accumulate(sq)

            @pl.when(i == num_tiles - 1)
            def _partial():
                row = jax.lax.broadcasted_iota(jnp.int32, (tile_rows, _LANES), 0)
                accumulate(jnp.where(row < tail_rows, sq, 0.0))

    return kernel


def _weighted_square_sum(x_states):
    """Plain-jnp sum of per-state weighted squares over an (N, 4) array."""
    xs = x_states.astype(jnp.float32)
    w = jnp.asarray(_WEIGHTS, jnp.float32)
    return jnp.sum(xs * xs * w)


def cartpole_integral_cost(x, u=None, *, tile_rows: int = 4096,
                           min_states_for_kernel: int = 4096):
    """Pallas implementation of CartpoleIntegralCost.forward (mean cost).

    x: array of shape (..., 4); returns a float32 scalar.
    u is accepted for API parity but ignored (as in the PyTorch module).
    """
    del u
    x = jnp.asarray(x)
    assert x.shape[-1] == _STATE_DIM, "last axis must be the 4-dim cartpole state"
    if x.dtype not in (jnp.float32, jnp.bfloat16):
        x = x.astype(jnp.float32)        # bf16 inputs stream as bf16 (half HBM traffic)

    n_states = x.size // _STATE_DIM
    if n_states == 0:
        return jnp.float32(float("nan"))  # torch: mean over an empty tensor is nan

    flat = x.reshape(-1)                  # row-major; free for contiguous input
    n_elems = flat.shape[0]
    bulk_elems = (n_elems // _LANES) * _LANES        # multiple of 128 (and of 4)
    rows = bulk_elems // _LANES

    if n_states < min_states_for_kernel or rows == 0:
        # Tiny inputs: pallas_call launch + wrapper overhead dominates; just
        # evaluate the jnp expression directly.
        return _weighted_square_sum(x.reshape(-1, _STATE_DIM)) / jnp.float32(n_states)

    # Ragged tail (< 32 states) handled with plain jnp -- avoids padding /
    # copying the whole input just to round it up to a multiple of 128 lanes.
    tail_sum = jnp.float32(0.0)
    if bulk_elems != n_elems:
        tail_sum = _weighted_square_sum(flat[bulk_elems:].reshape(-1, _STATE_DIM))
        flat = flat[:bulk_elems]

    x2 = flat.reshape(rows, _LANES)       # lane-dense view; state dim == lane % 4

    tr = max(8, (int(tile_rows) // 8) * 8)
    rows_rounded = ((rows + 7) // 8) * 8
    tile_rows_eff = min(tr, rows_rounded)
    num_tiles = (rows + tile_rows_eff - 1) // tile_rows_eff

    acc = pl.pallas_call(
        _make_cost_kernel(tile_rows_eff, rows),
        out_shape=jax.ShapeDtypeStruct((8, _LANES), jnp.float32),
        grid_spec=pltpu.PrefetchScalarGridSpec(
            num_scalar_prefetch=0,
            grid=(num_tiles,),
            in_specs=[pl.BlockSpec((tile_rows_eff, _LANES), lambda i: (i, 0))],
            out_specs=pl.BlockSpec((8, _LANES), lambda i: (0, 0)),
        ),
        compiler_params=pltpu.CompilerParams(
            dimension_semantics=("arbitrary",),
        ),
    )(x2)

    # Per-lane weights [6, .1, 5, .1] repeating every 4 lanes; applied once to
    # the tiny (8,128) partial-sum block, then the single cross-lane reduce.
    w_lane = jnp.tile(jnp.asarray(_WEIGHTS, jnp.float32), _LANES // _STATE_DIM)
    bulk_sum = jnp.sum(acc * w_lane)
    return (bulk_sum + tail_sum) / jnp.float32(n_states)


def _reference_cost(x):
    x = jnp.asarray(x, jnp.float32)
    return jnp.mean(6.0 * x[..., 0] ** 2 + 0.1 * x[..., 1] ** 2
                    + 5.0 * x[..., 2] ** 2 + 0.1 * x[..., 3] ** 2)


if __name__ == "__main__":
    key = jax.random.PRNGKey(0)
    k0, k1, k2 = jax.random.split(key, 3)

    def _check(x, **kw):
        got = jax.block_until_ready(cartpole_integral_cost(x, **kw))
        want = jax.block_until_ready(_reference_cost(x))
        assert jnp.allclose(got, want, rtol=1e-5, atol=1e-5), (got, want, x.shape)

    # Small shape consistent with the module (batch=16, horizon=8, state=4);
    # force the Pallas path even though the fast path would normally take it.
    x = jax.random.normal(k0, (16, 8, 4), dtype=jnp.float32)
    _check(x, min_states_for_kernel=0)
    _check(x)                                    # jnp fast path, same answer

    # Ragged shape: n_states % 32 != 0 (tail handled in the wrapper) plus a
    # partial final tile (masked in-kernel).
    x_odd = jax.random.normal(k1, (7, 13, 4), dtype=jnp.float32)
    _check(x_odd, min_states_for_kernel=0)

    # Multi-tile path: several grid steps, a masked partial last tile, and a
    # ragged tail, all exercised with a deliberately small tile.
    x_mid = jax.random.normal(k2, (257, 8, 4), dtype=jnp.float32)
    _check(x_mid, min_states_for_kernel=0, tile_rows=24)

    print("KERNEL_OK")
</pallas_src>

<mosaic_0001>
module attributes {stable_mosaic.version = 11 : i64} {
  func.func @kernel(%arg0: i32, %arg1: memref<8x128xf32, #tpu.memory_space<vmem>>, %arg2: memref<8x128xf32, #tpu.memory_space<vmem>>) attributes {dimension_semantics = [#tpu.dimension_semantics<arbitrary>], iteration_bounds = array<i64: 1>, scalar_prefetch = 0 : i64, scratch_operands = 0 : i64, tpu.core_type = #tpu.core_type<tc>, window_params = [{transform_indices = @transform_0, window_bounds = array<i64: 8, 128>}, {pipeline_mode = #tpu.pipeline_mode<synchronous>, transform_indices = @transform_1, window_bounds = array<i64: 8, 128>}]} {
    %c0_i32 = arith.constant 0 : i32
    %0 = arith.cmpi eq, %arg0, %c0_i32 : i32
    %1 = arith.extui %0 : i1 to i32
    %c0_i32_0 = arith.constant 0 : i32
    %2 = arith.cmpi ne, %1, %c0_i32_0 : i32
    scf.if %2 {
      %cst = arith.constant 0.000000e+00 : f32
      %11 = vector.broadcast %cst : f32 to vector<8x128xf32>
      %c0_6 = arith.constant 0 : index
      %c0_7 = arith.constant 0 : index
      %12 = vector.load %arg2[%c0_6, %c0_7] : memref<8x128xf32, #tpu.memory_space<vmem>>, vector<8x128xf32>
      tpu.vector_store %arg2[%c0_6, %c0_7], %11 {strides = array<i32>} : memref<8x128xf32, #tpu.memory_space<vmem>>, vector<8x128xf32>,
    } else {
    }
    %c0 = arith.constant 0 : index
    %c0_1 = arith.constant 0 : index
    %3 = vector.load %arg1[%c0, %c0_1] : memref<8x128xf32, #tpu.memory_space<vmem>>, vector<8x128xf32>
    %4 = arith.mulf %3, %3 : vector<8x128xf32>
    %c0_i32_2 = arith.constant 0 : i32
    %5 = arith.cmpi slt, %arg0, %c0_i32_2 : i32
    %6 = arith.extui %5 : i1 to i32
    %c0_i32_3 = arith.constant 0 : i32
    %7 = arith.cmpi ne, %6, %c0_i32_3 : i32
    scf.if %7 {
      %c0_6 = arith.constant 0 : index
      %c0_7 = arith.constant 0 : index
      %11 = vector.load %arg2[%c0_6, %c0_7] : memref<8x128xf32, #tpu.memory_space<vmem>>, vector<8x128xf32>
      %12 = vector.shape_cast %4 : vector<8x128xf32> to vector<1x8x128xf32>
      %cst = arith.constant dense<0.000000e+00> : vector<8x128xf32>
      %13 = vector.multi_reduction <add>, %12, %cst [0] : vector<1x8x128xf32> to vector<8x128xf32>
      %14 = arith.addf %11, %13 : vector<8x128xf32>
      %c0_8 = arith.constant 0 : index
      %c0_9 = arith.constant 0 : index
      %15 = vector.load %arg2[%c0_8, %c0_9] : memref<8x128xf32, #tpu.memory_space<vmem>>, vector<8x128xf32>
      tpu.vector_store %arg2[%c0_8, %c0_9], %14 {strides = array<i32>} : memref<8x128xf32, #tpu.memory_space<vmem>>, vector<8x128xf32>,
    } else {
    }
    %c0_i32_4 = arith.constant 0 : i32
    %8 = arith.cmpi eq, %arg0, %c0_i32_4 : i32
    %9 = arith.extui %8 : i1 to i32
    %c0_i32_5 = arith.constant 0 : i32
    %10 = arith.cmpi ne, %9, %c0_i32_5 : i32
    scf.if %10 {
      %11 = tpu.iota {dimensions = array<i32: 0>} : vector<8x128xi32>
      %c4_i32 = arith.constant 4 : i32
      %12 = vector.broadcast %c4_i32 : i32 to vector<8x128xi32>
      %13 = arith.cmpi slt, %11, %12 : vector<8x128xi32>
      %cst = arith.constant 0.000000e+00 : f32
      %14 = vector.broadcast %cst : f32 to vector<8x128xf32>
      %15 = arith.select %13, %4, %14 : vector<8x128xi1>, vector<8x128xf32>
      %c0_6 = arith.constant 0 : index
      %c0_7 = arith.constant 0 : index
      %16 = vector.load %arg2[%c0_6, %c0_7] : memref<8x128xf32, #tpu.memory_space<vmem>>, vector<8x128xf32>
      %17 = vector.shape_cast %15 : vector<8x128xf32> to vector<1x8x128xf32>
      %cst_8 = arith.constant dense<0.000000e+00> : vector<8x128xf32>
      %18 = vector.multi_reduction <add>, %17, %cst_8 [0] : vector<1x8x128xf32> to vector<8x128xf32>
      %19 = arith.addf %16, %18 : vector<8x128xf32>
      %c0_9 = arith.constant 0 : index
      %c0_10 = arith.constant 0 : index
      %20 = vector.load %arg2[%c0_9, %c0_10] : memref<8x128xf32, #tpu.memory_space<vmem>>, vector<8x128xf32>
      tpu.vector_store %arg2[%c0_9, %c0_10], %19 {strides = array<i32>} : memref<8x128xf32, #tpu.memory_space<vmem>>, vector<8x128xf32>,
    } else {
    }
    return
  }
  func.func @transform_0(%arg0: i32) -> (i32, i32) {
    %c0_i32 = arith.constant 0 : i32
    %c0_i32_0 = arith.constant 0 : i32
    return %arg0, %c0_i32 : i32, i32
  }
  func.func @transform_1(%arg0: i32) -> (i32, i32) {
    %c0_i32 = arith.constant 0 : i32
    %c0_i32_0 = arith.constant 0 : i32
    %c0_i32_1 = arith.constant 0 : i32
    return %c0_i32, %c0_i32_0 : i32, i32
  }
}

</mosaic_0001>

<llo_original>
// kernel: tpu_custom_call.1
$region0: #{tpu_custom_call.1}
  #allocation0 [shape = 'u32[]', space=smem, size = 0x4, offset = 0x4, fixed_abs, tag = 'smem constant byte address 0x4 - core index']
  #allocation1 [shape = 'u32[144,128]{1,0:T(1,128)}', space=vmem, size = 0x12000, scoped, tag = 'internal scratch']
  %s0 = inlined_call_operand.hbm [shape: f32[4,128], index: 0, kind: input, shape index: {}]
  %s1 = inlined_call_operand.hbm [shape: f32[8,128], index: 1, kind: output, shape index: {}]
  %s2 = sld [smem:[#allocation0]]
  $region30: #{tpu_custom_call.1} parent=0
    _
  %s4 = ssub.s32 1, %s2
  %s5 = scalar_select 0, %s4, %s2
  $region1: #{tpu_custom_call.1} parent=0
    #allocation2 [shape = 'u8[4096]{0}', space=vmem, size = 0x1000, scoped, tag = 'input window, operand 0, single buffered']
    #allocation3 [shape = 's32[1]{0}', space=sflag, size = 0x4, scoped, tag = 'scoped memory for tpu_custom_call.1']
    #allocation4 [shape = 's32[1]{0}', space=sflag, size = 0x4, scoped, tag = 'scoped memory for tpu_custom_call.1']
    #allocation5 [shape = 'u8[4096]{0}', space=vmem, size = 0x1000, scoped, tag = 'output window, operand 0, single buffered']
    %6 = vsyncpa [#allocation3], 0
    %7 = vsyncpa [#allocation4], 0
    // Predicated region
    $region2: #{tpu_custom_call.1} parent=1 // pred_check
      _
    $region3: #{tpu_custom_call.1} parent=1 // pred_check_branch
      %9 = sbr.rel (0) target = $region5
    $region4: #{tpu_custom_call.1} parent=1 // pred_region
      %s11 = ssub.s32 128, 64
      %12 = vsyncadd [#allocation3], %s11
      %s13 = sshll.u32 [#allocation2], 4
      %s14 = int_to_ptr.vmem [resolvable:$true] %s13
      %19 = dma.hbm_to_vmem [thread:$0]  %s0, 64, %s14, [#allocation3], 64, 64, 4
    $region5: #{tpu_custom_call.1} parent=1 // pred_fallthru
      _
    // Predicated region
    $region6: #{tpu_custom_call.1} parent=1 // pred_check
      _
    $region7: #{tpu_custom_call.1} parent=1 // pred_check_branch
      %21 = sbr.rel (0) target = $region9
    $region8: #{tpu_custom_call.1} parent=1 // pred_region
      %22 = dma.done [#allocation3], 128
    $region9: #{tpu_custom_call.1} parent=1 // pred_fallthru
      _
    %p23 = scmp.eq.s32.totalorder 0, 0
    // Predicated region
    $region10: #{tpu_custom_call.1} parent=1 // pred_check
      %p24 = pneg %p23
    $region11: #{tpu_custom_call.1} parent=1 // pred_check_branch
      %26 = sbr.rel (%p24) target = $region13
    $region12: #{tpu_custom_call.1} parent=1 // pred_region
      %27 = vst [vmem:[#allocation5] sm:$0xff] 0.0
    $region13: #{tpu_custom_call.1} parent=1 // pred_fallthru
      _
    %v28 = vld [vmem:[#allocation2] sm:$0xff]
    %v29 = vmul.f32 %v28, %v28
    %p30 = scmp.lt.s32.totalorder 0, 0
    // Predicated region
    $region14: #{tpu_custom_call.1} parent=1 // pred_check
      %p31 = pneg %p30
    $region15: #{tpu_custom_call.1} parent=1 // pred_check_branch
      %33 = sbr.rel (%p31) target = $region17
    $region16: #{tpu_custom_call.1} parent=1 // pred_region
      %v34 = vld [vmem:[#allocation5] sm:$0xff]
      %v35 = vadd.f32 %v29, 0.0
      %v36 = vadd.f32 %v34, %v35
      %37 = vst [vmem:[#allocation5] sm:$0xff] %v36
    $region17: #{tpu_custom_call.1} parent=1 // pred_fallthru
      _
    // Predicated region
    $region18: #{tpu_custom_call.1} parent=1 // pred_check
      %p38 = pneg %p23
    $region19: #{tpu_custom_call.1} parent=1 // pred_check_branch
      %40 = sbr.rel (%p38) target = $region21
    $region20: #{tpu_custom_call.1} parent=1 // pred_region
      %v41 = vlaneseq
      %v42 = vshrl.u32 %v41, 7
      %vm43 = vcmp.lt.s32.totalorder %v42, 4
      %v44 = vsel %vm43, %v29, 0.0
      %v45 = vld [vmem:[#allocation5] sm:$0xff]
      %v46 = vadd.f32 %v44, 0.0
      %v47 = vadd.f32 %v45, %v46
      %48 = vst [vmem:[#allocation5] sm:$0xff] %v47
    $region21: #{tpu_custom_call.1} parent=1 // pred_fallthru
      _
    // Predicated region
    $region22: #{tpu_custom_call.1} parent=1 // pred_check
      _
    $region23: #{tpu_custom_call.1} parent=1 // pred_check_branch
      %50 = sbr.rel (0) target = $region25
    $region24: #{tpu_custom_call.1} parent=1 // pred_region
      %s52 = ssub.s32 128, 128
      %53 = vsyncadd [#allocation4], %s52
      %s55 = sshll.u32 [#allocation5], 4
      %s56 = int_to_ptr.vmem [resolvable:$true] %s55
      %58 = dma.vmem_to_hbm [thread:$0]  %s56, 128, %s1, [#allocation4]
    $region25: #{tpu_custom_call.1} parent=1 // pred_fallthru
      _
    // Predicated region
    $region26: #{tpu_custom_call.1} parent=1 // pred_check
      _
    $region27: #{tpu_custom_call.1} parent=1 // pred_check_branch
      %60 = sbr.rel (0) target = $region29
    $region28: #{tpu_custom_call.1} parent=1 // pred_region
      %61 = dma.done [#allocation4], 128
    $region29: #{tpu_custom_call.1} parent=1 // pred_fallthru
      _
    %62 = vsyncpa [#allocation3], 1
    %63 = vsyncpa [#allocation4], 1

</llo_original>
